<compile_context>
chip_gen: v5e
topology: v5e:2x2
jax: 0.10.0
libtpu: 0.0.40
codegen_flags: <defaults>
</compile_context>

<pallas_src>
import functools

import jax
import jax.numpy as jnp
import numpy as np
from jax.experimental import pallas as pl
from jax.experimental.pallas import tpu as pltpu


# ---------------------------------------------------------------------------
# Fused decoder kernel
# ---------------------------------------------------------------------------
def _decoder_kernel(*refs, L, ks, Ms):
    """refs = (x, w0, b0, ..., w_{L-1}, b_{L-1}, wc, bc, out, s0, ..., s_{L-1}).

    x      : (C0, M0)  channels-first activation matrix (pixels on lanes)
    w_i    : (K_i*K_i, Co_i, Ci_i)  per-tap transposed-conv weights (kk = kh*K + kw)
    b_i    : (Co_i, 1) transposed-conv bias
    wc, bc : (Cf, C_last), (Cf, 1)  final 1x1 conv
    out    : (Cf, M_total)
    s_i    : VMEM scratch (Co_i, M_{i+1}) holding layer-i output
    """
    x_ref = refs[0]
    layer_refs = [(refs[1 + 2 * i], refs[2 + 2 * i]) for i in range(L)]
    wc_ref = refs[1 + 2 * L]
    bc_ref = refs[2 + 2 * L]
    o_ref = refs[3 + 2 * L]
    scratch = refs[4 + 2 * L:]

    a = x_ref[...]                                        # (C_in, M_in)
    for i in range(L):
        w_ref, b_ref = layer_refs[i]
        s_ref = scratch[i]
        K, Mi = ks[i], Ms[i]
        Co = w_ref.shape[1]
        # Hoist the bias broadcast out of the per-tap loop (JAX does not CSE it).
        bias = jnp.broadcast_to(b_ref[...], (Co, Mi))
        # ConvTranspose2d (kernel == stride, padding 0): one small MXU matmul per
        # (kh, kw) tap, stored to a contiguous 128-aligned lane block of the scratch.
        for kk in range(K * K):
            y = jnp.dot(w_ref[kk], a, preferred_element_type=jnp.float32) + bias
            s_ref[:, kk * Mi:(kk + 1) * Mi] = y
        # BatchNorm2d (training-mode batch stats, gamma=1, beta=0) + LeakyReLU(0.01).
        y_full = s_ref[...]                               # (Co, K*K*Mi)
        mean = jnp.mean(y_full, axis=1, keepdims=True)
        var = jnp.mean(jnp.square(y_full - mean), axis=1, keepdims=True)
        z = (y_full - mean) * jax.lax.rsqrt(var + 1e-5)
        a = jnp.where(z >= 0, z, 0.01 * z)
    # Final 1x1 Conv2d + Tanh.
    out = jnp.dot(wc_ref[...], a, preferred_element_type=jnp.float32) + bc_ref[...]
    o_ref[...] = jnp.tanh(out)


# ---------------------------------------------------------------------------
# Decoder forward: layout prep in XLA, all compute in one Pallas kernel
# ---------------------------------------------------------------------------
def decoder_forward(x, params, config):
    N, C0, H0, W0 = x.shape
    L = config["transpose_bn_blocks"] - 1
    ch = config["transposebn_channels"]
    ks = [int(k) for k in config["transpose_kernel_size"][:L]]

    M0 = N * H0 * W0
    Ms = [M0]
    for i in range(L):
        Ms.append(Ms[-1] * ks[i] * ks[i])
    Cf = ch[-1]

    # Channels-first, pixels-on-lanes.
    xm = jnp.transpose(x, (1, 0, 2, 3)).reshape(C0, M0)

    inputs = [xm]
    for i in range(L):
        wt = params[f"tconv{i}_w"]                     # (Ci, Co, K, K) — PyTorch layout
        K = ks[i]
        # -> (K*K, Co, Ci) with kk = kh*K + kw, so w[kk] @ a is the (kh, kw) tap.
        w = jnp.transpose(wt, (2, 3, 1, 0)).reshape(K * K, ch[i + 1], ch[i])
        inputs += [w, params[f"tconv{i}_b"].reshape(ch[i + 1], 1)]
    inputs += [params["conv_w"][:, :, 0, 0], params["conv_b"].reshape(Cf, 1)]

    vmem = pl.BlockSpec(memory_space=pltpu.MemorySpace.VMEM)
    out_flat = pl.pallas_call(
        functools.partial(_decoder_kernel, L=L, ks=tuple(ks), Ms=tuple(Ms)),
        out_shape=jax.ShapeDtypeStruct((Cf, Ms[-1]), jnp.float32),
        in_specs=[vmem] * len(inputs),
        out_specs=vmem,
        scratch_shapes=[pltpu.VMEM((ch[i + 1], Ms[i + 1]), jnp.float32) for i in range(L)],
    )(*inputs)

    # Undo the per-layer (kh, kw)-block column ordering in ONE XLA transpose -> NCHW.
    # Column index = sum_i kk_i * M_i + (n*H0*W0 + h0*W0 + w0); true pixel height is
    # h0 * prod(K) + kh_0 * prod(K_{>0}) + ... + kh_{L-1} (same for width).
    dims = [Cf]
    for i in reversed(range(L)):
        dims += [ks[i], ks[i]]
    dims += [N, H0, W0]
    y = out_flat.reshape(dims)
    n_ax = 1 + 2 * L
    h_axes = [n_ax + 1] + [1 + 2 * (L - 1 - i) for i in range(L)]
    w_axes = [n_ax + 2] + [2 + 2 * (L - 1 - i) for i in range(L)]
    y = jnp.transpose(y, [n_ax, 0] + h_axes + w_axes)
    scale = int(np.prod(ks)) if L else 1
    return y.reshape(N, Cf, H0 * scale, W0 * scale)


# ---------------------------------------------------------------------------
# Pure-JAX reference (same math, no Pallas) for a sanity check
# ---------------------------------------------------------------------------
def decoder_reference(x, params, config):
    out = x
    for i in range(config["transpose_bn_blocks"] - 1):
        wt = params[f"tconv{i}_w"]
        bias = params[f"tconv{i}_b"]
        Ci, Co, K, _ = wt.shape
        N, _, H, W = out.shape
        y = jnp.einsum("nchw,cdkl->ndhkwl", out, wt).reshape(N, Co, H * K, W * K)
        y = y + bias[None, :, None, None]
        mean = jnp.mean(y, axis=(0, 2, 3), keepdims=True)
        var = jnp.mean((y - mean) ** 2, axis=(0, 2, 3), keepdims=True)
        z = (y - mean) / jnp.sqrt(var + 1e-5)
        out = jnp.where(z >= 0, z, 0.01 * z)
    wc = params["conv_w"][:, :, 0, 0]
    bc = params["conv_b"]
    y = jnp.einsum("nchw,dc->ndhw", out, wc) + bc[None, :, None, None]
    return jnp.tanh(y)


# ---------------------------------------------------------------------------
# Deterministic parameter construction
# ---------------------------------------------------------------------------
def make_params(config, key):
    params = {}
    ch = config["transposebn_channels"]
    ks = config["transpose_kernel_size"]
    for i in range(config["transpose_bn_blocks"] - 1):
        key, k1, k2 = jax.random.split(key, 3)
        Ci, Co, K = ch[i], ch[i + 1], ks[i]
        params[f"tconv{i}_w"] = 0.1 * jax.random.normal(k1, (Ci, Co, K, K), jnp.float32)
        params[f"tconv{i}_b"] = 0.1 * jax.random.normal(k2, (Co,), jnp.float32)
    key, k1, k2 = jax.random.split(key, 3)
    Ci, Co = ch[-2], ch[-1]
    params["conv_w"] = 0.1 * jax.random.normal(k1, (Co, Ci, 1, 1), jnp.float32)
    params["conv_b"] = 0.1 * jax.random.normal(k2, (Co,), jnp.float32)
    return params


if __name__ == "__main__":
    config = {
        "transpose_bn_blocks": 3,
        "transposebn_channels": [4, 8, 6, 3],
        "transpose_kernel_size": [2, 2],
        "transpose_kernel_strides": [2, 2],  # unused by the module (it passes kernel_size)
        "latent_dim": 4,
    }

    key = jax.random.PRNGKey(0)
    key, kx, kp = jax.random.split(key, 3)
    x = jax.random.normal(kx, (2, 4, 8, 8), jnp.float32)  # NCHW latent
    params = make_params(config, kp)

    out = jax.block_until_ready(decoder_forward(x, params, config))
    ref = jax.block_until_ready(decoder_reference(x, params, config))

    assert out.shape == (2, 3, 32, 32), out.shape
    assert np.allclose(np.asarray(out), np.asarray(ref), rtol=1e-3, atol=1e-3)

    print("KERNEL_OK")
</pallas_src>

<mosaic_0001>
module attributes {stable_mosaic.version = 11 : i64} {
  func.func @_decoder_kernel(%arg0: memref<4x128xf32, #tpu.memory_space<vmem>>, %arg1: memref<4x8x4xf32, #tpu.memory_space<vmem>>, %arg2: memref<8x1xf32, #tpu.memory_space<vmem>>, %arg3: memref<4x6x8xf32, #tpu.memory_space<vmem>>, %arg4: memref<6x1xf32, #tpu.memory_space<vmem>>, %arg5: memref<3x6xf32, #tpu.memory_space<vmem>>, %arg6: memref<3x1xf32, #tpu.memory_space<vmem>>, %arg7: memref<3x2048xf32, #tpu.memory_space<vmem>>, %arg8: memref<8x512xf32, #tpu.memory_space<vmem>>, %arg9: memref<6x2048xf32, #tpu.memory_space<vmem>>) attributes {dimension_semantics = [], scalar_prefetch = 0 : i64, scratch_operands = 2 : i64, tpu.core_type = #tpu.core_type<tc>} {
    %c0 = arith.constant 0 : index
    %c0_0 = arith.constant 0 : index
    %0 = vector.load %arg0[%c0, %c0_0] : memref<4x128xf32, #tpu.memory_space<vmem>>, vector<4x128xf32>
    %c0_1 = arith.constant 0 : index
    %c0_2 = arith.constant 0 : index
    %1 = vector.load %arg2[%c0_1, %c0_2] : memref<8x1xf32, #tpu.memory_space<vmem>>, vector<8x1xf32>
    %2 = vector.shape_cast %1 : vector<8x1xf32> to vector<8x1xf32>
    %3 = vector.broadcast %2 : vector<8x1xf32> to vector<8x128xf32>
    %c0_3 = arith.constant 0 : index
    %c0_4 = arith.constant 0 : index
    %c0_5 = arith.constant 0 : index
    %4 = vector.load %arg1[%c0_3, %c0_4, %c0_5] : memref<4x8x4xf32, #tpu.memory_space<vmem>>, vector<1x8x4xf32>
    %5 = vector.shape_cast %4 : vector<1x8x4xf32> to vector<8x4xf32>
    %cst = arith.constant dense<0.000000e+00> : vector<8x128xf32>
    %6 = tpu.matmul %5, %0, %cst {dimension_numbers = #tpu.dot_dimension_numbers<[1], [0], [0], [1], [0, 0, 1, 1], [], []>} : vector<8x4xf32>, vector<4x128xf32>, vector<8x128xf32> -> vector<8x128xf32>
    %7 = arith.addf %6, %3 : vector<8x128xf32>
    %c0_6 = arith.constant 0 : index
    %c0_7 = arith.constant 0 : index
    %8 = vector.load %arg8[%c0_6, %c0_7] : memref<8x512xf32, #tpu.memory_space<vmem>>, vector<8x128xf32>
    tpu.vector_store %arg8[%c0_6, %c0_7], %7 {strides = array<i32>} : memref<8x512xf32, #tpu.memory_space<vmem>>, vector<8x128xf32>,
    %c1 = arith.constant 1 : index
    %c0_8 = arith.constant 0 : index
    %c0_9 = arith.constant 0 : index
    %9 = vector.load %arg1[%c1, %c0_8, %c0_9] : memref<4x8x4xf32, #tpu.memory_space<vmem>>, vector<1x8x4xf32>
    %10 = vector.shape_cast %9 : vector<1x8x4xf32> to vector<8x4xf32>
    %cst_10 = arith.constant dense<0.000000e+00> : vector<8x128xf32>
    %11 = tpu.matmul %10, %0, %cst_10 {dimension_numbers = #tpu.dot_dimension_numbers<[1], [0], [0], [1], [0, 0, 1, 1], [], []>} : vector<8x4xf32>, vector<4x128xf32>, vector<8x128xf32> -> vector<8x128xf32>
    %12 = arith.addf %11, %3 : vector<8x128xf32>
    %c0_11 = arith.constant 0 : index
    %c128 = arith.constant 128 : index
    %13 = vector.load %arg8[%c0_11, %c128] : memref<8x512xf32, #tpu.memory_space<vmem>>, vector<8x128xf32>
    tpu.vector_store %arg8[%c0_11, %c128], %12 {strides = array<i32>} : memref<8x512xf32, #tpu.memory_space<vmem>>, vector<8x128xf32>,
    %c2 = arith.constant 2 : index
    %c0_12 = arith.constant 0 : index
    %c0_13 = arith.constant 0 : index
    %14 = vector.load %arg1[%c2, %c0_12, %c0_13] : memref<4x8x4xf32, #tpu.memory_space<vmem>>, vector<1x8x4xf32>
    %15 = vector.shape_cast %14 : vector<1x8x4xf32> to vector<8x4xf32>
    %cst_14 = arith.constant dense<0.000000e+00> : vector<8x128xf32>
    %16 = tpu.matmul %15, %0, %cst_14 {dimension_numbers = #tpu.dot_dimension_numbers<[1], [0], [0], [1], [0, 0, 1, 1], [], []>} : vector<8x4xf32>, vector<4x128xf32>, vector<8x128xf32> -> vector<8x128xf32>
    %17 = arith.addf %16, %3 : vector<8x128xf32>
    %c0_15 = arith.constant 0 : index
    %c256 = arith.constant 256 : index
    %18 = vector.load %arg8[%c0_15, %c256] : memref<8x512xf32, #tpu.memory_space<vmem>>, vector<8x128xf32>
    tpu.vector_store %arg8[%c0_15, %c256], %17 {strides = array<i32>} : memref<8x512xf32, #tpu.memory_space<vmem>>, vector<8x128xf32>,
    %c3 = arith.constant 3 : index
    %c0_16 = arith.constant 0 : index
    %c0_17 = arith.constant 0 : index
    %19 = vector.load %arg1[%c3, %c0_16, %c0_17] : memref<4x8x4xf32, #tpu.memory_space<vmem>>, vector<1x8x4xf32>
    %20 = vector.shape_cast %19 : vector<1x8x4xf32> to vector<8x4xf32>
    %cst_18 = arith.constant dense<0.000000e+00> : vector<8x128xf32>
    %21 = tpu.matmul %20, %0, %cst_18 {dimension_numbers = #tpu.dot_dimension_numbers<[1], [0], [0], [1], [0, 0, 1, 1], [], []>} : vector<8x4xf32>, vector<4x128xf32>, vector<8x128xf32> -> vector<8x128xf32>
    %22 = arith.addf %21, %3 : vector<8x128xf32>
    %c0_19 = arith.constant 0 : index
    %c384 = arith.constant 384 : index
    %23 = vector.load %arg8[%c0_19, %c384] : memref<8x512xf32, #tpu.memory_space<vmem>>, vector<8x128xf32>
    tpu.vector_store %arg8[%c0_19, %c384], %22 {strides = array<i32>} : memref<8x512xf32, #tpu.memory_space<vmem>>, vector<8x128xf32>,
    %c0_20 = arith.constant 0 : index
    %c0_21 = arith.constant 0 : index
    %24 = vector.load %arg8[%c0_20, %c0_21] : memref<8x512xf32, #tpu.memory_space<vmem>>, vector<8x512xf32>
    %cst_22 = arith.constant dense<0.000000e+00> : vector<8xf32>
    %25 = vector.multi_reduction <add>, %24, %cst_22 [1] : vector<8x512xf32> to vector<8xf32>
    %26 = vector.shape_cast %25 : vector<8xf32> to vector<8x1xf32>
    %cst_23 = arith.constant 5.120000e+02 : f32
    %27 = vector.broadcast %cst_23 : f32 to vector<8x1xf32>
    %28 = arith.divf %26, %27 : vector<8x1xf32>
    %29 = vector.broadcast %28 : vector<8x1xf32> to vector<8x512xf32>
    %30 = arith.subf %24, %29 : vector<8x512xf32>
    %31 = arith.mulf %30, %30 : vector<8x512xf32>
    %cst_24 = arith.constant dense<0.000000e+00> : vector<8xf32>
    %32 = vector.multi_reduction <add>, %31, %cst_24 [1] : vector<8x512xf32> to vector<8xf32>
    %33 = vector.shape_cast %32 : vector<8xf32> to vector<8x1xf32>
    %cst_25 = arith.constant 5.120000e+02 : f32
    %34 = vector.broadcast %cst_25 : f32 to vector<8x1xf32>
    %35 = arith.divf %33, %34 : vector<8x1xf32>
    %36 = vector.broadcast %28 : vector<8x1xf32> to vector<8x512xf32>
    %37 = arith.subf %24, %36 : vector<8x512xf32>
    %cst_26 = arith.constant 9.99999974E-6 : f32
    %38 = vector.broadcast %cst_26 : f32 to vector<8x1xf32>
    %39 = arith.addf %35, %38 : vector<8x1xf32>
    %40 = math.rsqrt %39 : vector<8x1xf32>
    %41 = vector.broadcast %40 : vector<8x1xf32> to vector<8x512xf32>
    %42 = arith.mulf %37, %41 : vector<8x512xf32>
    %cst_27 = arith.constant 0.000000e+00 : f32
    %43 = vector.broadcast %cst_27 : f32 to vector<8x512xf32>
    %44 = arith.cmpf oge, %42, %43 : vector<8x512xf32>
    %cst_28 = arith.constant 0.00999999977 : f32
    %45 = vector.broadcast %cst_28 : f32 to vector<8x512xf32>
    %46 = arith.mulf %45, %42 : vector<8x512xf32>
    %47 = arith.select %44, %42, %46 : vector<8x512xi1>, vector<8x512xf32>
    %c0_29 = arith.constant 0 : index
    %c0_30 = arith.constant 0 : index
    %48 = vector.load %arg4[%c0_29, %c0_30] : memref<6x1xf32, #tpu.memory_space<vmem>>, vector<6x1xf32>
    %49 = vector.shape_cast %48 : vector<6x1xf32> to vector<6x1xf32>
    %50 = vector.broadcast %49 : vector<6x1xf32> to vector<6x512xf32>
    %c0_31 = arith.constant 0 : index
    %c0_32 = arith.constant 0 : index
    %c0_33 = arith.constant 0 : index
    %51 = vector.load %arg3[%c0_31, %c0_32, %c0_33] : memref<4x6x8xf32, #tpu.memory_space<vmem>>, vector<1x6x8xf32>
    %52 = vector.shape_cast %51 : vector<1x6x8xf32> to vector<6x8xf32>
    %cst_34 = arith.constant dense<0.000000e+00> : vector<6x512xf32>
    %53 = tpu.matmul %52, %47, %cst_34 {dimension_numbers = #tpu.dot_dimension_numbers<[1], [0], [0], [1], [0, 0, 1, 1], [], []>} : vector<6x8xf32>, vector<8x512xf32>, vector<6x512xf32> -> vector<6x512xf32>
    %54 = arith.addf %53, %50 : vector<6x512xf32>
    %c0_35 = arith.constant 0 : index
    %c0_36 = arith.constant 0 : index
    %55 = vector.load %arg9[%c0_35, %c0_36] : memref<6x2048xf32, #tpu.memory_space<vmem>>, vector<6x512xf32>
    tpu.vector_store %arg9[%c0_35, %c0_36], %54 {strides = array<i32>} : memref<6x2048xf32, #tpu.memory_space<vmem>>, vector<6x512xf32>,
    %c1_37 = arith.constant 1 : index
    %c0_38 = arith.constant 0 : index
    %c0_39 = arith.constant 0 : index
    %56 = vector.load %arg3[%c1_37, %c0_38, %c0_39] : memref<4x6x8xf32, #tpu.memory_space<vmem>>, vector<1x6x8xf32>
    %57 = vector.shape_cast %56 : vector<1x6x8xf32> to vector<6x8xf32>
    %cst_40 = arith.constant dense<0.000000e+00> : vector<6x512xf32>
    %58 = tpu.matmul %57, %47, %cst_40 {dimension_numbers = #tpu.dot_dimension_numbers<[1], [0], [0], [1], [0, 0, 1, 1], [], []>} : vector<6x8xf32>, vector<8x512xf32>, vector<6x512xf32> -> vector<6x512xf32>
    %59 = arith.addf %58, %50 : vector<6x512xf32>
    %c0_41 = arith.constant 0 : index
    %c512 = arith.constant 512 : index
    %60 = vector.load %arg9[%c0_41, %c512] : memref<6x2048xf32, #tpu.memory_space<vmem>>, vector<6x512xf32>
    tpu.vector_store %arg9[%c0_41, %c512], %59 {strides = array<i32>} : memref<6x2048xf32, #tpu.memory_space<vmem>>, vector<6x512xf32>,
    %c2_42 = arith.constant 2 : index
    %c0_43 = arith.constant 0 : index
    %c0_44 = arith.constant 0 : index
    %61 = vector.load %arg3[%c2_42, %c0_43, %c0_44] : memref<4x6x8xf32, #tpu.memory_space<vmem>>, vector<1x6x8xf32>
    %62 = vector.shape_cast %61 : vector<1x6x8xf32> to vector<6x8xf32>
    %cst_45 = arith.constant dense<0.000000e+00> : vector<6x512xf32>
    %63 = tpu.matmul %62, %47, %cst_45 {dimension_numbers = #tpu.dot_dimension_numbers<[1], [0], [0], [1], [0, 0, 1, 1], [], []>} : vector<6x8xf32>, vector<8x512xf32>, vector<6x512xf32> -> vector<6x512xf32>
    %64 = arith.addf %63, %50 : vector<6x512xf32>
    %c0_46 = arith.constant 0 : index
    %c1024 = arith.constant 1024 : index
    %65 = vector.load %arg9[%c0_46, %c1024] : memref<6x2048xf32, #tpu.memory_space<vmem>>, vector<6x512xf32>
    tpu.vector_store %arg9[%c0_46, %c1024], %64 {strides = array<i32>} : memref<6x2048xf32, #tpu.memory_space<vmem>>, vector<6x512xf32>,
    %c3_47 = arith.constant 3 : index
    %c0_48 = arith.constant 0 : index
    %c0_49 = arith.constant 0 : index
    %66 = vector.load %arg3[%c3_47, %c0_48, %c0_49] : memref<4x6x8xf32, #tpu.memory_space<vmem>>, vector<1x6x8xf32>
    %67 = vector.shape_cast %66 : vector<1x6x8xf32> to vector<6x8xf32>
    %cst_50 = arith.constant dense<0.000000e+00> : vector<6x512xf32>
    %68 = tpu.matmul %67, %47, %cst_50 {dimension_numbers = #tpu.dot_dimension_numbers<[1], [0], [0], [1], [0, 0, 1, 1], [], []>} : vector<6x8xf32>, vector<8x512xf32>, vector<6x512xf32> -> vector<6x512xf32>
    %69 = arith.addf %68, %50 : vector<6x512xf32>
    %c0_51 = arith.constant 0 : index
    %c1536 = arith.constant 1536 : index
    %70 = vector.load %arg9[%c0_51, %c1536] : memref<6x2048xf32, #tpu.memory_space<vmem>>, vector<6x512xf32>
    tpu.vector_store %arg9[%c0_51, %c1536], %69 {strides = array<i32>} : memref<6x2048xf32, #tpu.memory_space<vmem>>, vector<6x512xf32>,
    %c0_52 = arith.constant 0 : index
    %c0_53 = arith.constant 0 : index
    %71 = vector.load %arg9[%c0_52, %c0_53] : memref<6x2048xf32, #tpu.memory_space<vmem>>, vector<6x2048xf32>
    %cst_54 = arith.constant dense<0.000000e+00> : vector<6xf32>
    %72 = vector.multi_reduction <add>, %71, %cst_54 [1] : vector<6x2048xf32> to vector<6xf32>
    %73 = vector.shape_cast %72 : vector<6xf32> to vector<6x1xf32>
    %cst_55 = arith.constant 2.048000e+03 : f32
    %74 = vector.broadcast %cst_55 : f32 to vector<6x1xf32>
    %75 = arith.divf %73, %74 : vector<6x1xf32>
    %76 = vector.broadcast %75 : vector<6x1xf32> to vector<6x2048xf32>
    %77 = arith.subf %71, %76 : vector<6x2048xf32>
    %78 = arith.mulf %77, %77 : vector<6x2048xf32>
    %cst_56 = arith.constant dense<0.000000e+00> : vector<6xf32>
    %79 = vector.multi_reduction <add>, %78, %cst_56 [1] : vector<6x2048xf32> to vector<6xf32>
    %80 = vector.shape_cast %79 : vector<6xf32> to vector<6x1xf32>
    %cst_57 = arith.constant 2.048000e+03 : f32
    %81 = vector.broadcast %cst_57 : f32 to vector<6x1xf32>
    %82 = arith.divf %80, %81 : vector<6x1xf32>
    %83 = vector.broadcast %75 : vector<6x1xf32> to vector<6x2048xf32>
    %84 = arith.subf %71, %83 : vector<6x2048xf32>
    %cst_58 = arith.constant 9.99999974E-6 : f32
    %85 = vector.broadcast %cst_58 : f32 to vector<6x1xf32>
    %86 = arith.addf %82, %85 : vector<6x1xf32>
    %87 = math.rsqrt %86 : vector<6x1xf32>
    %88 = vector.broadcast %87 : vector<6x1xf32> to vector<6x2048xf32>
    %89 = arith.mulf %84, %88 : vector<6x2048xf32>
    %cst_59 = arith.constant 0.000000e+00 : f32
    %90 = vector.broadcast %cst_59 : f32 to vector<6x2048xf32>
    %91 = arith.cmpf oge, %89, %90 : vector<6x2048xf32>
    %cst_60 = arith.constant 0.00999999977 : f32
    %92 = vector.broadcast %cst_60 : f32 to vector<6x2048xf32>
    %93 = arith.mulf %92, %89 : vector<6x2048xf32>
    %94 = arith.select %91, %89, %93 : vector<6x2048xi1>, vector<6x2048xf32>
    %c0_61 = arith.constant 0 : index
    %c0_62 = arith.constant 0 : index
    %95 = vector.load %arg5[%c0_61, %c0_62] : memref<3x6xf32, #tpu.memory_space<vmem>>, vector<3x6xf32>
    %cst_63 = arith.constant dense<0.000000e+00> : vector<3x2048xf32>
    %96 = tpu.matmul %95, %94, %cst_63 {dimension_numbers = #tpu.dot_dimension_numbers<[1], [0], [0], [1], [0, 0, 1, 1], [], []>} : vector<3x6xf32>, vector<6x2048xf32>, vector<3x2048xf32> -> vector<3x2048xf32>
    %c0_64 = arith.constant 0 : index
    %c0_65 = arith.constant 0 : index
    %97 = vector.load %arg6[%c0_64, %c0_65] : memref<3x1xf32, #tpu.memory_space<vmem>>, vector<3x1xf32>
    %98 = vector.broadcast %97 : vector<3x1xf32> to vector<3x2048xf32>
    %99 = arith.addf %96, %98 : vector<3x2048xf32>
    %100 = math.tanh %99 : vector<3x2048xf32>
    %c0_66 = arith.constant 0 : index
    %c0_67 = arith.constant 0 : index
    %101 = vector.load %arg7[%c0_66, %c0_67] : memref<3x2048xf32, #tpu.memory_space<vmem>>, vector<3x2048xf32>
    tpu.vector_store %arg7[%c0_66, %c0_67], %100 {strides = array<i32>} : memref<3x2048xf32, #tpu.memory_space<vmem>>, vector<3x2048xf32>,
    return
  }
}

</mosaic_0001>

<llo_original>
// kernel: tpu_custom_call.1
$region0: #{tpu_custom_call.1}
  #allocation0 [shape = 'u32[]', space=smem, size = 0x4, offset = 0x4, fixed_abs, tag = 'smem constant byte address 0x4 - core index']
  #allocation1 [shape = 'u32[72,128]{1,0:T(1,128)}', space=vmem, size = 0x9000, scoped, tag = 'internal scratch']
  #allocation2 [shape = 'f32[8,512]{1,0:T(8,128)}', space=vmem, size = 0x4000, scoped, tag = 'scratch operand']
  #allocation3 [shape = 'f32[6,2048]{1,0:T(8,128)}', space=vmem, size = 0x10000, scoped, tag = 'scratch operand']
  %s0 = inlined_call_operand.vmem [shape: f32[4,128], index: 0, kind: input, shape index: {}]
  %s1 = inlined_call_operand.vmem [shape: f32[4,8,4], index: 1, kind: input, shape index: {}]
  %s2 = inlined_call_operand.vmem [shape: f32[8,1], index: 2, kind: input, shape index: {}]
  %s3 = inlined_call_operand.vmem [shape: f32[4,6,8], index: 3, kind: input, shape index: {}]
  %s4 = inlined_call_operand.vmem [shape: f32[6,1], index: 4, kind: input, shape index: {}]
  %s5 = inlined_call_operand.vmem [shape: f32[3,6], index: 5, kind: input, shape index: {}]
  %s6 = inlined_call_operand.vmem [shape: f32[3,1], index: 6, kind: input, shape index: {}]
  %s7 = inlined_call_operand.hbm [shape: f32[3,2048], index: 7, kind: output, shape index: {}]
  %s8 = sld [smem:[#allocation0]]
  $region38: #{tpu_custom_call.1} parent=0
    _
  %s10 = ssub.s32 1, %s8
  %s11 = scalar_select 0, %s10, %s8
  $region1: #{tpu_custom_call.1} parent=0
    #allocation4 [shape = 'u8[32768]{0}', space=vmem, size = 0x8000, scoped, tag = 'output window, operand 0, single buffered']
    #allocation5 [shape = 's32[1]{0}', space=sflag, size = 0x4, scoped, tag = 'scoped memory for tpu_custom_call.1']
    %12 = vsyncpa [#allocation5], 0
    // Predicated region
    $region2: #{tpu_custom_call.1} parent=1 // pred_check
      _
    $region3: #{tpu_custom_call.1} parent=1 // pred_check_branch
      %14 = sbr.rel (0) target = $region5
    $region4: #{tpu_custom_call.1} parent=1 // pred_region
      _
    $region5: #{tpu_custom_call.1} parent=1 // pred_fallthru
      _
    // Predicated region
    $region6: #{tpu_custom_call.1} parent=1 // pred_check
      _
    $region7: #{tpu_custom_call.1} parent=1 // pred_check_branch
      %16 = sbr.rel (0) target = $region9
    $region8: #{tpu_custom_call.1} parent=1 // pred_region
      _
    $region9: #{tpu_custom_call.1} parent=1 // pred_fallthru
      _
    // Predicated region
    $region10: #{tpu_custom_call.1} parent=1 // pred_check
      _
    $region11: #{tpu_custom_call.1} parent=1 // pred_check_branch
      %18 = sbr.rel (0) target = $region13
    $region12: #{tpu_custom_call.1} parent=1 // pred_region
      _
    $region13: #{tpu_custom_call.1} parent=1 // pred_fallthru
      _
    // Predicated region
    $region14: #{tpu_custom_call.1} parent=1 // pred_check
      _
    $region15: #{tpu_custom_call.1} parent=1 // pred_check_branch
      %20 = sbr.rel (0) target = $region17
    $region16: #{tpu_custom_call.1} parent=1 // pred_region
      _
    $region17: #{tpu_custom_call.1} parent=1 // pred_fallthru
      _
    // Predicated region
    $region18: #{tpu_custom_call.1} parent=1 // pred_check
      _
    $region19: #{tpu_custom_call.1} parent=1 // pred_check_branch
      %22 = sbr.rel (0) target = $region21
    $region20: #{tpu_custom_call.1} parent=1 // pred_region
      _
    $region21: #{tpu_custom_call.1} parent=1 // pred_fallthru
      _
    // Predicated region
    $region22: #{tpu_custom_call.1} parent=1 // pred_check
      _
    $region23: #{tpu_custom_call.1} parent=1 // pred_check_branch
      %24 = sbr.rel (0) target = $region25
    $region24: #{tpu_custom_call.1} parent=1 // pred_region
      _
    $region25: #{tpu_custom_call.1} parent=1 // pred_fallthru
      _
    // Predicated region
    $region26: #{tpu_custom_call.1} parent=1 // pred_check
      _
    $region27: #{tpu_custom_call.1} parent=1 // pred_check_branch
      %26 = sbr.rel (0) target = $region29
    $region28: #{tpu_custom_call.1} parent=1 // pred_region
      _
    $region29: #{tpu_custom_call.1} parent=1 // pred_fallthru
      _
    %v27 = vld [vmem:[%s0] sm:$0xf]
    %v28 = vld [vmem:[%s2] sm:$0xff]
    %30 = vset.pattern.permute.xlu0 0
    %31 = vperm.xlu0 %30, %v28
    %v32 = vpop.permute.xlu0 %31
    %v34 = vld [vmem:[%s1] sm:$0xff]
    %vm35 = vcmask 31744
    %v37 = vsel %vm35, %v34, 0
    %vm39 = vcmask 1043456
    %v41 = vsel %vm39, %v27, 0
    %43 = vmatpush.msra.mxu0 0.0
    %44 = vmatpush.msra.mxu0 0.0
    %45 = vmatpush.msra.mxu0 0.0
    %46 = vmatpush.msra.mxu0 0.0
    %47 = vmatpush.msra.mxu0 0.0
    %48 = vmatpush.msra.mxu0 0.0
    %49 = vmatpush.msra.mxu0 0.0
    %50 = vmatpush.msra.mxu0 0.0
    %51 = vmatpush.msra.mxu0 0.0
    %52 = vmatpush.msra.mxu0 0.0
    %53 = vmatpush.msra.mxu0 0.0
    %54 = vmatpush.msra.mxu0 0.0
    %55 = vmatpush.msra.mxu0 0.0
    %56 = vmatpush.msra.mxu0 0.0
    %57 = vmatpush.msra.mxu0 0.0
    %58 = vmatpush.msra.mxu0 %v41
    %59 = vmatmul.f32.gmra.mxu0 %v37
    %v60 = vpop.f32.mrf.mxu0
    %v61 = vadd.f32 %v32, %v60
    %62 = vdwg.mxu0
    %63 = vst [vmem:[#allocation2] sm:$0xff] %v61
    %s64 = scalar_lea.vmem %s1, 8
    %v65 = vld [vmem:[%s64] sm:$0xff]
    %v67 = vsel %vm35, %v65, 0
    %69 = vmatpush.msra.mxu0 0.0
    %70 = vmatpush.msra.mxu0 0.0
    %71 = vmatpush.msra.mxu0 0.0
    %72 = vmatpush.msra.mxu0 0.0
    %73 = vmatpush.msra.mxu0 0.0
    %74 = vmatpush.msra.mxu0 0.0
    %75 = vmatpush.msra.mxu0 0.0
    %76 = vmatpush.msra.mxu0 0.0
    %77 = vmatpush.msra.mxu0 0.0
    %78 = vmatpush.msra.mxu0 0.0
    %79 = vmatpush.msra.mxu0 0.0
    %80 = vmatpush.msra.mxu0 0.0
    %81 = vmatpush.msra.mxu0 0.0
    %82 = vmatpush.msra.mxu0 0.0
    %83 = vmatpush.msra.mxu0 0.0
    %84 = vmatpush.msra.mxu0 %v41
    %85 = vmatmul.f32.gmra.mxu0 %v67
    %v86 = vpop.f32.mrf.mxu0
    %v87 = vadd.f32 %v32, %v86
    %88 = vdwg.mxu0
    %89 = vst [vmem:[#allocation2 + $0x8] sm:$0xff] %v87
    %s90 = scalar_lea.vmem %s1, 16
    %v91 = vld [vmem:[%s90] sm:$0xff]
    %v93 = vsel %vm35, %v91, 0
    %95 = vmatpush.msra.mxu0 0.0
    %96 = vmatpush.msra.mxu0 0.0
    %97 = vmatpush.msra.mxu0 0.0
    %98 = vmatpush.msra.mxu0 0.0
    %99 = vmatpush.msra.mxu0 0.0
    %100 = vmatpush.msra.mxu0 0.0
    %101 = vmatpush.msra.mxu0 0.0
    %102 = vmatpush.msra.mxu0 0.0
    %103 = vmatpush.msra.mxu0 0.0
    %104 = vmatpush.msra.mxu0 0.0
    %105 = vmatpush.msra.mxu0 0.0
    %106 = vmatpush.msra.mxu0 0.0
    %107 = vmatpush.msra.mxu0 0.0
    %108 = vmatpush.msra.mxu0 0.0
    %109 = vmatpush.msra.mxu0 0.0
    %110 = vmatpush.msra.mxu0 %v41
    %111 = vmatmul.f32.gmra.mxu0 %v93
    %v112 = vpop.f32.mrf.mxu0
    %v113 = vadd.f32 %v32, %v112
    %114 = vdwg.mxu0
    %115 = vst [vmem:[#allocation2 + $0x10] sm:$0xff] %v113
    %s116 = scalar_lea.vmem %s1, 24
    %v117 = vld [vmem:[%s116] sm:$0xff]
    %v119 = vsel %vm35, %v117, 0
    %121 = vmatpush.msra.mxu0 0.0
    %122 = vmatpush.msra.mxu0 0.0
    %123 = vmatpush.msra.mxu0 0.0
    %124 = vmatpush.msra.mxu0 0.0
    %125 = vmatpush.msra.mxu0 0.0
    %126 = vmatpush.msra.mxu0 0.0
    %127 = vmatpush.msra.mxu0 0.0
    %128 = vmatpush.msra.mxu0 0.0
    %129 = vmatpush.msra.mxu0 0.0
    %130 = vmatpush.msra.mxu0 0.0
    %131 = vmatpush.msra.mxu0 0.0
    %132 = vmatpush.msra.mxu0 0.0
    %133 = vmatpush.msra.mxu0 0.0
    %134 = vmatpush.msra.mxu0 0.0
    %135 = vmatpush.msra.mxu0 0.0
    %136 = vmatpush.msra.mxu0 %v41
    %137 = vmatmul.f32.gmra.mxu0 %v119
    %v138 = vpop.f32.mrf.mxu0
    %v139 = vadd.f32 %v32, %v138
    %140 = vdwg.mxu0
    %141 = vst [vmem:[#allocation2 + $0x18] sm:$0xff] %v139
    %v142 = vld [vmem:[#allocation2] sm:$0xff]
    %v143 = vld [vmem:[#allocation2 + $0x8] sm:$0xff]
    %v144 = vld [vmem:[#allocation2 + $0x10] sm:$0xff]
    %v145 = vld [vmem:[#allocation2 + $0x18] sm:$0xff]
    %v146 = vadd.f32 %v142, %v143
    %v147 = vadd.f32 %v146, %v144
    %v148 = vadd.f32 %v147, %v145
    %149 = vadd.xlane.f32.xlu0 %v148
    %v150 = vpop.xlane.xlu0 %149
    %v151 = vrcp.pop 512.0
    %v152 = vmul.f32 512.0, %v151
    %v153 = vsub.f32 1.0, %v152
    %v154 = vmul.f32 %v151, %v153
    %v155 = vadd.f32 %v151, %v154
    %vm156 = vweird.f32 %v151
    %v157 = vsel %vm156, %v151, %v155
    %v158 = vmul.f32 %v150, %v157
    %v159 = vsub.f32 %v142, %v158
    %v160 = vsub.f32 %v143, %v158
    %v161 = vsub.f32 %v144, %v158
    %v162 = vsub.f32 %v145, %v158
    %v163 = vmul.f32 %v159, %v159
    %v164 = vmul.f32 %v160, %v160
    %v165 = vmul.f32 %v161, %v161
    %v166 = vmul.f32 %v162, %v162
    %v167 = vadd.f32 %v163, %v164
    %v168 = vadd.f32 %v167, %v165
    %v169 = vadd.f32 %v168, %v166
    %170 = vadd.xlane.f32.xlu0 %v169
    %v171 = vpop.xlane.xlu0 %170
    %v172 = vmul.f32 %v171, %v157
    %v173 = vadd.f32 %v172, 1e-05
    %v174 = vrsqrt.pop %v173
    %v175 = vmul.f32 %v174, %v173
    %v176 = vmul.f32 %v175, %v174
    %v177 = vmul.f32 0.5, %v176
    %v178 = vsub.f32 1.5, %v177
    %v179 = vmul.f32 %v174, %v178
    %vm180 = vweird.f32 %v173
    %vm181 = vweird.f32 %v174
    %vm182 = vmor %vm180, %vm181
    %v183 = vsel %vm182, %v174, %v179
    %v184 = vmul.f32 %v159, %v183
    %v185 = vmul.f32 %v160, %v183
    %v186 = vmul.f32 %v161, %v183
    %v187 = vmul.f32 %v162, %v183
    %vm188 = vcmp.ge.f32.partialorder %v184, 0.0
    %vm189 = vcmp.ge.f32.partialorder %v185, 0.0
    %vm190 = vcmp.ge.f32.partialorder %v186, 0.0
    %vm191 = vcmp.ge.f32.partialorder %v187, 0.0
    %v192 = vmul.f32 %v184, 0.01
    %v193 = vmul.f32 %v185, 0.01
    %v194 = vmul.f32 %v186, 0.01
    %v195 = vmul.f32 %v187, 0.01
    %v196 = vsel %vm188, %v184, %v192
    %v197 = vsel %vm189, %v185, %v193
    %v198 = vsel %vm190, %v186, %v194
    %v199 = vsel %vm191, %v187, %v195
    %v200 = vld [vmem:[%s4] sm:$0x3f]
    %202 = vset.pattern.permute.xlu0 0
    %203 = vperm.xlu0 %202, %v200
    %v204 = vpop.permute.xlu0 %203
    %v206 = vld [vmem:[%s3] sm:$0x3f]
    %vm207 = vcmask 64512
    %v209 = vsel %vm207, %v206, 0
    %211 = vmatpush.msra.mxu0 0.0
    %212 = vmatpush.msra.mxu0 0.0
    %213 = vmatpush.msra.mxu0 0.0
    %214 = vmatpush.msra.mxu0 0.0
    %215 = vmatpush.msra.mxu0 0.0
    %216 = vmatpush.msra.mxu0 0.0
    %217 = vmatpush.msra.mxu0 0.0
    %218 = vmatpush.msra.mxu0 0.0
    %219 = vmatpush.msra.mxu0 0.0
    %220 = vmatpush.msra.mxu0 0.0
    %221 = vmatpush.msra.mxu0 0.0
    %222 = vmatpush.msra.mxu0 0.0
    %223 = vmatpush.msra.mxu0 0.0
    %224 = vmatpush.msra.mxu0 0.0
    %225 = vmatpush.msra.mxu0 0.0
    %226 = vmatpush.msra.mxu0 %v196
    %227 = vmatmul.f32.gmra.mxu0 %v209
    %v228 = vpop.f32.mrf.mxu0
    %v229 = vadd.f32 %v204, %v228
    %230 = vdwg.mxu0
    %231 = vmatpush.msra.mxu0 0.0
    %232 = vmatpush.msra.mxu0 0.0
    %233 = vmatpush.msra.mxu0 0.0
    %234 = vmatpush.msra.mxu0 0.0
    %235 = vmatpush.msra.mxu0 0.0
    %236 = vmatpush.msra.mxu0 0.0
    %237 = vmatpush.msra.mxu0 0.0
    %238 = vmatpush.msra.mxu0 0.0
    %239 = vmatpush.msra.mxu0 0.0
    %240 = vmatpush.msra.mxu0 0.0
    %241 = vmatpush.msra.mxu0 0.0
    %242 = vmatpush.msra.mxu0 0.0
    %243 = vmatpush.msra.mxu0 0.0
    %244 = vmatpush.msra.mxu0 0.0
    %245 = vmatpush.msra.mxu0 0.0
    %246 = vmatpush.msra.mxu0 %v197
    %247 = vmatmul.f32.gmra.mxu0 %v209
    %v248 = vpop.f32.mrf.mxu0
    %v249 = vadd.f32 %v204, %v248
    %250 = vdwg.mxu0
    %251 = vmatpush.msra.mxu0 0.0
    %252 = vmatpush.msra.mxu0 0.0
    %253 = vmatpush.msra.mxu0 0.0
    %254 = vmatpush.msra.mxu0 0.0
    %255 = vmatpush.msra.mxu0 0.0
    %256 = vmatpush.msra.mxu0 0.0
    %257 = vmatpush.msra.mxu0 0.0
    %258 = vmatpush.msra.mxu0 0.0
    %259 = vmatpush.msra.mxu0 0.0
    %260 = vmatpush.msra.mxu0 0.0
    %261 = vmatpush.msra.mxu0 0.0
    %262 = vmatpush.msra.mxu0 0.0
    %263 = vmatpush.msra.mxu0 0.0
    %264 = vmatpush.msra.mxu0 0.0
    %265 = vmatpush.msra.mxu0 0.0
    %266 = vmatpush.msra.mxu0 %v198
    %267 = vmatmul.f32.gmra.mxu0 %v209
    %v268 = vpop.f32.mrf.mxu0
    %v269 = vadd.f32 %v204, %v268
    %270 = vdwg.mxu0
    %271 = vmatpush.msra.mxu0 0.0
    %272 = vmatpush.msra.mxu0 0.0
    %273 = vmatpush.msra.mxu0 0.0
    %274 = vmatpush.msra.mxu0 0.0
    %275 = vmatpush.msra.mxu0 0.0
    %276 = vmatpush.msra.mxu0 0.0
    %277 = vmatpush.msra.mxu0 0.0
    %278 = vmatpush.msra.mxu0 0.0
    %279 = vmatpush.msra.mxu0 0.0
    %280 = vmatpush.msra.mxu0 0.0
    %281 = vmatpush.msra.mxu0 0.0
    %282 = vmatpush.msra.mxu0 0.0
    %283 = vmatpush.msra.mxu0 0.0
    %284 = vmatpush.msra.mxu0 0.0
    %285 = vmatpush.msra.mxu0 0.0
    %286 = vmatpush.msra.mxu0 %v199
    %287 = vmatmul.f32.gmra.mxu0 %v209
    %v288 = vpop.f32.mrf.mxu0
    %v289 = vadd.f32 %v204, %v288
    %290 = vdwg.mxu0
    %291 = vst [vmem:[#allocation3] sm:$0x3f] %v229
    %292 = vst [vmem:[#allocation3 + $0x8] sm:$0x3f] %v249
    %293 = vst [vmem:[#allocation3 + $0x10] sm:$0x3f] %v269
    %294 = vst [vmem:[#allocation3 + $0x18] sm:$0x3f] %v289
    %s295 = scalar_lea.vmem %s3, 8
    %v296 = vld [vmem:[%s295] sm:$0x3f]
    %v298 = vsel %vm207, %v296, 0
    %300 = vmatpush.msra.mxu0 0.0
    %301 = vmatpush.msra.mxu0 0.0
    %302 = vmatpush.msra.mxu0 0.0
    %303 = vmatpush.msra.mxu0 0.0
    %304 = vmatpush.msra.mxu0 0.0
    %305 = vmatpush.msra.mxu0 0.0
    %306 = vmatpush.msra.mxu0 0.0
    %307 = vmatpush.msra.mxu0 0.0
    %308 = vmatpush.msra.mxu0 0.0
    %309 = vmatpush.msra.mxu0 0.0
    %310 = vmatpush.msra.mxu0 0.0
    %311 = vmatpush.msra.mxu0 0.0
    %312 = vmatpush.msra.mxu0 0.0
    %313 = vmatpush.msra.mxu0 0.0
    %314 = vmatpush.msra.mxu0 0.0
    %315 = vmatpush.msra.mxu0 %v196
    %316 = vmatmul.f32.gmra.mxu0 %v298
    %v317 = vpop.f32.mrf.mxu0
    %v318 = vadd.f32 %v204, %v317
    %319 = vdwg.mxu0
    %320 = vmatpush.msra.mxu0 0.0
    %321 = vmatpush.msra.mxu0 0.0
    %322 = vmatpush.msra.mxu0 0.0
    %323 = vmatpush.msra.mxu0 0.0
    %324 = vmatpush.msra.mxu0 0.0
    %325 = vmatpush.msra.mxu0 0.0
    %326 = vmatpush.msra.mxu0 0.0
    %327 = vmatpush.msra.mxu0 0.0
    %328 = vmatpush.msra.mxu0 0.0
    %329 = vmatpush.msra.mxu0 0.0
    %330 = vmatpush.msra.mxu0 0.0
    %331 = vmatpush.msra.mxu0 0.0
    %332 = vmatpush.msra.mxu0 0.0
    %333 = vmatpush.msra.mxu0 0.0
    %334 = vmatpush.msra.mxu0 0.0
    %335 = vmatpush.msra.mxu0 %v197
    %336 = vmatmul.f32.gmra.mxu0 %v298
    %v337 = vpop.f32.mrf.mxu0
    %v338 = vadd.f32 %v204, %v337
    %339 = vdwg.mxu0
    %340 = vmatpush.msra.mxu0 0.0
    %341 = vmatpush.msra.mxu0 0.0
    %342 = vmatpush.msra.mxu0 0.0
    %343 = vmatpush.msra.mxu0 0.0
    %344 = vmatpush.msra.mxu0 0.0
    %345 = vmatpush.msra.mxu0 0.0
    %346 = vmatpush.msra.mxu0 0.0
    %347 = vmatpush.msra.mxu0 0.0
    %348 = vmatpush.msra.mxu0 0.0
    %349 = vmatpush.msra.mxu0 0.0
    %350 = vmatpush.msra.mxu0 0.0
    %351 = vmatpush.msra.mxu0 0.0
    %352 = vmatpush.msra.mxu0 0.0
    %353 = vmatpush.msra.mxu0 0.0
    %354 = vmatpush.msra.mxu0 0.0
    %355 = vmatpush.msra.mxu0 %v198
    %356 = vmatmul.f32.gmra.mxu0 %v298
    %v357 = vpop.f32.mrf.mxu0
    %v358 = vadd.f32 %v204, %v357
    %359 = vdwg.mxu0
    %360 = vmatpush.msra.mxu0 0.0
    %361 = vmatpush.msra.mxu0 0.0
    %362 = vmatpush.msra.mxu0 0.0
    %363 = vmatpush.msra.mxu0 0.0
    %364 = vmatpush.msra.mxu0 0.0
    %365 = vmatpush.msra.mxu0 0.0
    %366 = vmatpush.msra.mxu0 0.0
    %367 = vmatpush.msra.mxu0 0.0
    %368 = vmatpush.msra.mxu0 0.0
    %369 = vmatpush.msra.mxu0 0.0
    %370 = vmatpush.msra.mxu0 0.0
    %371 = vmatpush.msra.mxu0 0.0
    %372 = vmatpush.msra.mxu0 0.0
    %373 = vmatpush.msra.mxu0 0.0
    %374 = vmatpush.msra.mxu0 0.0
    %375 = vmatpush.msra.mxu0 %v199
    %376 = vmatmul.f32.gmra.mxu0 %v298
    %v377 = vpop.f32.mrf.mxu0
    %v378 = vadd.f32 %v204, %v377
    %379 = vdwg.mxu0
    %380 = vst [vmem:[#allocation3 + $0x20] sm:$0x3f] %v318
    %381 = vst [vmem:[#allocation3 + $0x28] sm:$0x3f] %v338
    %382 = vst [vmem:[#allocation3 + $0x30] sm:$0x3f] %v358
    %383 = vst [vmem:[#allocation3 + $0x38] sm:$0x3f] %v378
    %s384 = scalar_lea.vmem %s3, 16
    %v385 = vld [vmem:[%s384] sm:$0x3f]
    %v387 = vsel %vm207, %v385, 0
    %389 = vmatpush.msra.mxu0 0.0
    %390 = vmatpush.msra.mxu0 0.0
    %391 = vmatpush.msra.mxu0 0.0
    %392 = vmatpush.msra.mxu0 0.0
    %393 = vmatpush.msra.mxu0 0.0
    %394 = vmatpush.msra.mxu0 0.0
    %395 = vmatpush.msra.mxu0 0.0
    %396 = vmatpush.msra.mxu0 0.0
    %397 = vmatpush.msra.mxu0 0.0
    %398 = vmatpush.msra.mxu0 0.0
    %399 = vmatpush.msra.mxu0 0.0
    %400 = vmatpush.msra.mxu0 0.0
    %401 = vmatpush.msra.mxu0 0.0
    %402 = vmatpush.msra.mxu0 0.0
    %403 = vmatpush.msra.mxu0 0.0
    %404 = vmatpush.msra.mxu0 %v196
    %405 = vmatmul.f32.gmra.mxu0 %v387
    %v406 = vpop.f32.mrf.mxu0
    %v407 = vadd.f32 %v204, %v406
    %408 = vdwg.mxu0
    %409 = vmatpush.msra.mxu0 0.0
    %410 = vmatpush.msra.mxu0 0.0
    %411 = vmatpush.msra.mxu0 0.0
    %412 = vmatpush.msra.mxu0 0.0
    %413 = vmatpush.msra.mxu0 0.0
    %414 = vmatpush.msra.mxu0 0.0
    %415 = vmatpush.msra.mxu0 0.0
    %416 = vmatpush.msra.mxu0 0.0
    %417 = vmatpush.msra.mxu0 0.0
    %418 = vmatpush.msra.mxu0 0.0
    %419 = vmatpush.msra.mxu0 0.0
    %420 = vmatpush.msra.mxu0 0.0
    %421 = vmatpush.msra.mxu0 0.0
    %422 = vmatpush.msra.mxu0 0.0
    %423 = vmatpush.msra.mxu0 0.0
    %424 = vmatpush.msra.mxu0 %v197
    %425 = vmatmul.f32.gmra.mxu0 %v387
    %v426 = vpop.f32.mrf.mxu0
    %v427 = vadd.f32 %v204, %v426
    %428 = vdwg.mxu0
    %429 = vmatpush.msra.mxu0 0.0
    %430 = vmatpush.msra.mxu0 0.0
    %431 = vmatpush.msra.mxu0 0.0
    %432 = vmatpush.msra.mxu0 0.0
    %433 = vmatpush.msra.mxu0 0.0
    %434 = vmatpush.msra.mxu0 0.0
    %435 = vmatpush.msra.mxu0 0.0
    %436 = vmatpush.msra.mxu0 0.0
    %437 = vmatpush.msra.mxu0 0.0
    %438 = vmatpush.msra.mxu0 0.0
    %439 = vmatpush.msra.mxu0 0.0
    %440 = vmatpush.msra.mxu0 0.0
    %441 = vmatpush.msra.mxu0 0.0
    %442 = vmatpush.msra.mxu0 0.0
    %443 = vmatpush.msra.mxu0 0.0
    %444 = vmatpush.msra.mxu0 %v198
    %445 = vmatmul.f32.gmra.mxu0 %v387
    %v446 = vpop.f32.mrf.mxu0
    %v447 = vadd.f32 %v204, %v446
    %448 = vdwg.mxu0
    %449 = vmatpush.msra.mxu0 0.0
    %450 = vmatpush.msra.mxu0 0.0
    %451 = vmatpush.msra.mxu0 0.0
    %452 = vmatpush.msra.mxu0 0.0
    %453 = vmatpush.msra.mxu0 0.0
    %454 = vmatpush.msra.mxu0 0.0
    %455 = vmatpush.msra.mxu0 0.0
    %456 = vmatpush.msra.mxu0 0.0
    %457 = vmatpush.msra.mxu0 0.0
    %458 = vmatpush.msra.mxu0 0.0
    %459 = vmatpush.msra.mxu0 0.0
    %460 = vmatpush.msra.mxu0 0.0
    %461 = vmatpush.msra.mxu0 0.0
    %462 = vmatpush.msra.mxu0 0.0
    %463 = vmatpush.msra.mxu0 0.0
    %464 = vmatpush.msra.mxu0 %v199
    %465 = vmatmul.f32.gmra.mxu0 %v387
    %v466 = vpop.f32.mrf.mxu0
    %v467 = vadd.f32 %v204, %v466
    %468 = vdwg.mxu0
    %469 = vst [vmem:[#allocation3 + $0x40] sm:$0x3f] %v407
    %470 = vst [vmem:[#allocation3 + $0x48] sm:$0x3f] %v427
    %471 = vst [vmem:[#allocation3 + $0x50] sm:$0x3f] %v447
    %472 = vst [vmem:[#allocation3 + $0x58] sm:$0x3f] %v467
    %s473 = scalar_lea.vmem %s3, 24
    %v474 = vld [vmem:[%s473] sm:$0x3f]
    %v476 = vsel %vm207, %v474, 0
    %478 = vmatpush.msra.mxu0 0.0
    %479 = vmatpush.msra.mxu0 0.0
    %480 = vmatpush.msra.mxu0 0.0
    %481 = vmatpush.msra.mxu0 0.0
    %482 = vmatpush.msra.mxu0 0.0
    %483 = vmatpush.msra.mxu0 0.0
    %484 = vmatpush.msra.mxu0 0.0
    %485 = vmatpush.msra.mxu0 0.0
    %486 = vmatpush.msra.mxu0 0.0
    %487 = vmatpush.msra.mxu0 0.0
    %488 = vmatpush.msra.mxu0 0.0
    %489 = vmatpush.msra.mxu0 0.0
    %490 = vmatpush.msra.mxu0 0.0
    %491 = vmatpush.msra.mxu0 0.0
    %492 = vmatpush.msra.mxu0 0.0
    %493 = vmatpush.msra.mxu0 %v196
    %494 = vmatmul.f32.gmra.mxu0 %v476
    %v495 = vpop.f32.mrf.mxu0
    %v496 = vadd.f32 %v204, %v495
    %497 = vdwg.mxu0
    %498 = vmatpush.msra.mxu0 0.0
    %499 = vmatpush.msra.mxu0 0.0
    %500 = vmatpush.msra.mxu0 0.0
    %501 = vmatpush.msra.mxu0 0.0
    %502 = vmatpush.msra.mxu0 0.0
    %503 = vmatpush.msra.mxu0 0.0
    %504 = vmatpush.msra.mxu0 0.0
    %505 = vmatpush.msra.mxu0 0.0
    %506 = vmatpush.msra.mxu0 0.0
    %507 = vmatpush.msra.mxu0 0.0
    %508 = vmatpush.msra.mxu0 0.0
    %509 = vmatpush.msra.mxu0 0.0
    %510 = vmatpush.msra.mxu0 0.0
    %511 = vmatpush.msra.mxu0 0.0
    %512 = vmatpush.msra.mxu0 0.0
    %513 = vmatpush.msra.mxu0 %v197
    %514 = vmatmul.f32.gmra.mxu0 %v476
    %v515 = vpop.f32.mrf.mxu0
    %v516 = vadd.f32 %v204, %v515
    %517 = vdwg.mxu0
    %518 = vmatpush.msra.mxu0 0.0
    %519 = vmatpush.msra.mxu0 0.0
    %520 = vmatpush.msra.mxu0 0.0
    %521 = vmatpush.msra.mxu0 0.0
    %522 = vmatpush.msra.mxu0 0.0
    %523 = vmatpush.msra.mxu0 0.0
    %524 = vmatpush.msra.mxu0 0.0
    %525 = vmatpush.msra.mxu0 0.0
    %526 = vmatpush.msra.mxu0 0.0
    %527 = vmatpush.msra.mxu0 0.0
    %528 = vmatpush.msra.mxu0 0.0
    %529 = vmatpush.msra.mxu0 0.0
    %530 = vmatpush.msra.mxu0 0.0
    %531 = vmatpush.msra.mxu0 0.0
    %532 = vmatpush.msra.mxu0 0.0
    %533 = vmatpush.msra.mxu0 %v198
    %534 = vmatmul.f32.gmra.mxu0 %v476
    %v535 = vpop.f32.mrf.mxu0
    %v536 = vadd.f32 %v204, %v535
    %537 = vdwg.mxu0
    %538 = vmatpush.msra.mxu0 0.0
    %539 = vmatpush.msra.mxu0 0.0
    %540 = vmatpush.msra.mxu0 0.0
    %541 = vmatpush.msra.mxu0 0.0
    %542 = vmatpush.msra.mxu0 0.0
    %543 = vmatpush.msra.mxu0 0.0
    %544 = vmatpush.msra.mxu0 0.0
    %545 = vmatpush.msra.mxu0 0.0
    %546 = vmatpush.msra.mxu0 0.0
    %547 = vmatpush.msra.mxu0 0.0
    %548 = vmatpush.msra.mxu0 0.0
    %549 = vmatpush.msra.mxu0 0.0
    %550 = vmatpush.msra.mxu0 0.0
    %551 = vmatpush.msra.mxu0 0.0
    %552 = vmatpush.msra.mxu0 0.0
    %553 = vmatpush.msra.mxu0 %v199
    %554 = vmatmul.f32.gmra.mxu0 %v476
    %v555 = vpop.f32.mrf.mxu0
    %v556 = vadd.f32 %v204, %v555
    %557 = vdwg.mxu0
    %558 = vst [vmem:[#allocation3 + $0x60] sm:$0x3f] %v496
    %559 = vst [vmem:[#allocation3 + $0x68] sm:$0x3f] %v516
    %560 = vst [vmem:[#allocation3 + $0x70] sm:$0x3f] %v536
    %561 = vst [vmem:[#allocation3 + $0x78] sm:$0x3f] %v556
    %v562 = vld [vmem:[#allocation3] sm:$0x3f]
    %v563 = vld [vmem:[#allocation3 + $0x8] sm:$0x3f]
    %v564 = vld [vmem:[#allocation3 + $0x10] sm:$0x3f]
    %v565 = vld [vmem:[#allocation3 + $0x18] sm:$0x3f]
    %v566 = vld [vmem:[#allocation3 + $0x20] sm:$0x3f]
    %v567 = vld [vmem:[#allocation3 + $0x28] sm:$0x3f]
    %v568 = vld [vmem:[#allocation3 + $0x30] sm:$0x3f]
    %v569 = vld [vmem:[#allocation3 + $0x38] sm:$0x3f]
    %v570 = vld [vmem:[#allocation3 + $0x40] sm:$0x3f]
    %v571 = vld [vmem:[#allocation3 + $0x48] sm:$0x3f]
    %v572 = vld [vmem:[#allocation3 + $0x50] sm:$0x3f]
    %v573 = vld [vmem:[#allocation3 + $0x58] sm:$0x3f]
    %v574 = vld [vmem:[#allocation3 + $0x60] sm:$0x3f]
    %v575 = vld [vmem:[#allocation3 + $0x68] sm:$0x3f]
    %v576 = vld [vmem:[#allocation3 + $0x70] sm:$0x3f]
    %v577 = vld [vmem:[#allocation3 + $0x78] sm:$0x3f]
    %vm578 = vcmask 1045504
    %v579 = vsel %vm578, %v562, 0.0
    %v580 = vsel %vm578, %v563, 0.0
    %v581 = vadd.f32 %v579, %v580
    %v582 = vsel %vm578, %v564, 0.0
    %v583 = vadd.f32 %v581, %v582
    %v584 = vsel %vm578, %v565, 0.0
    %v585 = vadd.f32 %v583, %v584
    %v586 = vsel %vm578, %v566, 0.0
    %v587 = vadd.f32 %v585, %v586
    %v588 = vsel %vm578, %v567, 0.0
    %v589 = vadd.f32 %v587, %v588
    %v590 = vsel %vm578, %v568, 0.0
    %v591 = vadd.f32 %v589, %v590
    %v592 = vsel %vm578, %v569, 0.0
    %v593 = vadd.f32 %v591, %v592
    %v594 = vsel %vm578, %v570, 0.0
    %v595 = vadd.f32 %v593, %v594
    %v596 = vsel %vm578, %v571, 0.0
    %v597 = vadd.f32 %v595, %v596
    %v598 = vsel %vm578, %v572, 0.0
    %v599 = vadd.f32 %v597, %v598
    %v600 = vsel %vm578, %v573, 0.0
    %v601 = vadd.f32 %v599, %v600
    %v602 = vsel %vm578, %v574, 0.0
    %v603 = vadd.f32 %v601, %v602
    %v604 = vsel %vm578, %v575, 0.0
    %v605 = vadd.f32 %v603, %v604
    %v606 = vsel %vm578, %v576, 0.0
    %v607 = vadd.f32 %v605, %v606
    %v608 = vsel %vm578, %v577, 0.0
    %v609 = vadd.f32 %v607, %v608
    %610 = vadd.xlane.f32.xlu0 %v609
    %v611 = vpop.xlane.xlu0 %610
    %v612 = vrcp.pop 2048.0
    %v613 = vmul.f32 2048.0, %v612
    %v614 = vsub.f32 1.0, %v613
    %v615 = vmul.f32 %v612, %v614
    %v616 = vadd.f32 %v612, %v615
    %vm617 = vweird.f32 %v612
    %v618 = vsel %vm617, %v612, %v616
    %v619 = vmul.f32 %v611, %v618
    %v620 = vsub.f32 %v562, %v619
    %v621 = vsub.f32 %v563, %v619
    %v622 = vsub.f32 %v564, %v619
    %v623 = vsub.f32 %v565, %v619
    %v624 = vsub.f32 %v566, %v619
    %v625 = vsub.f32 %v567, %v619
    %v626 = vsub.f32 %v568, %v619
    %v627 = vsub.f32 %v569, %v619
    %v628 = vsub.f32 %v570, %v619
    %v629 = vsub.f32 %v571, %v619
    %v630 = vsub.f32 %v572, %v619
    %v631 = vsub.f32 %v573, %v619
    %v632 = vsub.f32 %v574, %v619
    %v633 = vsub.f32 %v575, %v619
    %v634 = vsub.f32 %v576, %v619
    %v635 = vsub.f32 %v577, %v619
    %v636 = vmul.f32 %v620, %v620
    %v637 = vmul.f32 %v621, %v621
    %v638 = vmul.f32 %v622, %v622
    %v639 = vmul.f32 %v623, %v623
    %v640 = vmul.f32 %v624, %v624
    %v641 = vmul.f32 %v625, %v625
    %v642 = vmul.f32 %v626, %v626
    %v643 = vmul.f32 %v627, %v627
    %v644 = vmul.f32 %v628, %v628
    %v645 = vmul.f32 %v629, %v629
    %v646 = vmul.f32 %v630, %v630
    %v647 = vmul.f32 %v631, %v631
    %v648 = vmul.f32 %v632, %v632
    %v649 = vmul.f32 %v633, %v633
    %v650 = vmul.f32 %v634, %v634
    %v651 = vmul.f32 %v635, %v635
    %v652 = vsel %vm578, %v636, 0.0
    %v653 = vsel %vm578, %v637, 0.0
    %v654 = vadd.f32 %v652, %v653
    %v655 = vsel %vm578, %v638, 0.0
    %v656 = vadd.f32 %v654, %v655
    %v657 = vsel %vm578, %v639, 0.0
    %v658 = vadd.f32 %v656, %v657
    %v659 = vsel %vm578, %v640, 0.0
    %v660 = vadd.f32 %v658, %v659
    %v661 = vsel %vm578, %v641, 0.0
    %v662 = vadd.f32 %v660, %v661
    %v663 = vsel %vm578, %v642, 0.0
    %v664 = vadd.f32 %v662, %v663
    %v665 = vsel %vm578, %v643, 0.0
    %v666 = vadd.f32 %v664, %v665
    %v667 = vsel %vm578, %v644, 0.0
    %v668 = vadd.f32 %v666, %v667
    %v669 = vsel %vm578, %v645, 0.0
    %v670 = vadd.f32 %v668, %v669
    %v671 = vsel %vm578, %v646, 0.0
    %v672 = vadd.f32 %v670, %v671
    %v673 = vsel %vm578, %v647, 0.0
    %v674 = vadd.f32 %v672, %v673
    %v675 = vsel %vm578, %v648, 0.0
    %v676 = vadd.f32 %v674, %v675
    %v677 = vsel %vm578, %v649, 0.0
    %v678 = vadd.f32 %v676, %v677
    %v679 = vsel %vm578, %v650, 0.0
    %v680 = vadd.f32 %v678, %v679
    %v681 = vsel %vm578, %v651, 0.0
    %v682 = vadd.f32 %v680, %v681
    %683 = vadd.xlane.f32.xlu0 %v682
    %v684 = vpop.xlane.xlu0 %683
    %v685 = vmul.f32 %v684, %v618
    %v686 = vadd.f32 %v685, 1e-05
    %v687 = vrsqrt.pop %v686
    %v688 = vmul.f32 %v687, %v686
    %v689 = vmul.f32 %v688, %v687
    %v690 = vmul.f32 0.5, %v689
    %v691 = vsub.f32 1.5, %v690
    %v692 = vmul.f32 %v687, %v691
    %vm693 = vweird.f32 %v686
    %vm694 = vweird.f32 %v687
    %vm695 = vmor %vm693, %vm694
    %v696 = vsel %vm695, %v687, %v692
    %v697 = vmul.f32 %v620, %v696
    %v698 = vmul.f32 %v621, %v696
    %v699 = vmul.f32 %v622, %v696
    %v700 = vmul.f32 %v623, %v696
    %v701 = vmul.f32 %v624, %v696
    %v702 = vmul.f32 %v625, %v696
    %v703 = vmul.f32 %v626, %v696
    %v704 = vmul.f32 %v627, %v696
    %v705 = vmul.f32 %v628, %v696
    %v706 = vmul.f32 %v629, %v696
    %v707 = vmul.f32 %v630, %v696
    %v708 = vmul.f32 %v631, %v696
    %v709 = vmul.f32 %v632, %v696
    %v710 = vmul.f32 %v633, %v696
    %v711 = vmul.f32 %v634, %v696
    %v712 = vmul.f32 %v635, %v696
    %vm713 = vcmp.ge.f32.partialorder %v697, 0.0
    %vm714 = vcmp.ge.f32.partialorder %v698, 0.0
    %vm715 = vcmp.ge.f32.partialorder %v699, 0.0
    %vm716 = vcmp.ge.f32.partialorder %v700, 0.0
    %vm717 = vcmp.ge.f32.partialorder %v701, 0.0
    %vm718 = vcmp.ge.f32.partialorder %v702, 0.0
    %vm719 = vcmp.ge.f32.partialorder %v703, 0.0
    %vm720 = vcmp.ge.f32.partialorder %v704, 0.0
    %vm721 = vcmp.ge.f32.partialorder %v705, 0.0
    %vm722 = vcmp.ge.f32.partialorder %v706, 0.0
    %vm723 = vcmp.ge.f32.partialorder %v707, 0.0
    %vm724 = vcmp.ge.f32.partialorder %v708, 0.0
    %vm725 = vcmp.ge.f32.partialorder %v709, 0.0
    %vm726 = vcmp.ge.f32.partialorder %v710, 0.0
    %vm727 = vcmp.ge.f32.partialorder %v711, 0.0
    %vm728 = vcmp.ge.f32.partialorder %v712, 0.0
    %v729 = vmul.f32 %v697, 0.01
    %v730 = vmul.f32 %v698, 0.01
    %v731 = vmul.f32 %v699, 0.01
    %v732 = vmul.f32 %v700, 0.01
    %v733 = vmul.f32 %v701, 0.01
    %v734 = vmul.f32 %v702, 0.01
    %v735 = vmul.f32 %v703, 0.01
    %v736 = vmul.f32 %v704, 0.01
    %v737 = vmul.f32 %v705, 0.01
    %v738 = vmul.f32 %v706, 0.01
    %v739 = vmul.f32 %v707, 0.01
    %v740 = vmul.f32 %v708, 0.01
    %v741 = vmul.f32 %v709, 0.01
    %v742 = vmul.f32 %v710, 0.01
    %v743 = vmul.f32 %v711, 0.01
    %v744 = vmul.f32 %v712, 0.01
    %v745 = vsel %vm713, %v697, %v729
    %v746 = vsel %vm714, %v698, %v730
    %v747 = vsel %vm715, %v699, %v731
    %v748 = vsel %vm716, %v700, %v732
    %v749 = vsel %vm717, %v701, %v733
    %v750 = vsel %vm718, %v702, %v734
    %v751 = vsel %vm719, %v703, %v735
    %v752 = vsel %vm720, %v704, %v736
    %v753 = vsel %vm721, %v705, %v737
    %v754 = vsel %vm722, %v706, %v738
    %v755 = vsel %vm723, %v707, %v739
    %v756 = vsel %vm724, %v708, %v740
    %v757 = vsel %vm725, %v709, %v741
    %v758 = vsel %vm726, %v710, %v742
    %v759 = vsel %vm727, %v711, %v743
    %v760 = vsel %vm728, %v712, %v744
    %v761 = vld [vmem:[%s5] sm:$0x7]
    %v762 = vld [vmem:[%s6] sm:$0x7]
    %764 = vset.pattern.permute.xlu0 0
    %765 = vperm.xlu0 %764, %v762
    %v766 = vpop.permute.xlu0 %765
    %vm768 = vcmask 48128
    %v770 = vsel %vm768, %v761, 0
    %v773 = vsel %vm578, %v745, 0
    %v776 = vsel %vm578, %v746, 0
    %v779 = vsel %vm578, %v747, 0
    %v782 = vsel %vm578, %v748, 0
    %v785 = vsel %vm578, %v749, 0
    %v788 = vsel %vm578, %v750, 0
    %v791 = vsel %vm578, %v751, 0
    %v794 = vsel %vm578, %v752, 0
    %v797 = vsel %vm578, %v753, 0
    %v800 = vsel %vm578, %v754, 0
    %v803 = vsel %vm578, %v755, 0
    %v806 = vsel %vm578, %v756, 0
    %v809 = vsel %vm578, %v757, 0
    %v812 = vsel %vm578, %v758, 0
    %v815 = vsel %vm578, %v759, 0
    %v818 = vsel %vm578, %v760, 0
    %820 = vmatpush.msra.mxu0 0.0
    %821 = vmatpush.msra.mxu0 0.0
    %822 = vmatpush.msra.mxu0 0.0
    %823 = vmatpush.msra.mxu0 0.0
    %824 = vmatpush.msra.mxu0 0.0
    %825 = vmatpush.msra.mxu0 0.0
    %826 = vmatpush.msra.mxu0 0.0
    %827 = vmatpush.msra.mxu0 0.0
    %828 = vmatpush.msra.mxu0 0.0
    %829 = vmatpush.msra.mxu0 0.0
    %830 = vmatpush.msra.mxu0 0.0
    %831 = vmatpush.msra.mxu0 0.0
    %832 = vmatpush.msra.mxu0 0.0
    %833 = vmatpush.msra.mxu0 0.0
    %834 = vmatpush.msra.mxu0 0.0
    %835 = vmatpush.msra.mxu0 %v773
    %836 = vmatmul.f32.gmra.mxu0 %v770
    %v837 = vpop.f32.mrf.mxu0
    %v838 = vadd.f32 %v766, %v837
    %839 = vdwg.mxu0
    %840 = vmatpush.msra.mxu0 0.0
    %841 = vmatpush.msra.mxu0 0.0
    %842 = vmatpush.msra.mxu0 0.0
    %843 = vmatpush.msra.mxu0 0.0
    %844 = vmatpush.msra.mxu0 0.0
    %845 = vmatpush.msra.mxu0 0.0
    %846 = vmatpush.msra.mxu0 0.0
    %847 = vmatpush.msra.mxu0 0.0
    %848 = vmatpush.msra.mxu0 0.0
    %849 = vmatpush.msra.mxu0 0.0
    %850 = vmatpush.msra.mxu0 0.0
    %851 = vmatpush.msra.mxu0 0.0
    %852 = vmatpush.msra.mxu0 0.0
    %853 = vmatpush.msra.mxu0 0.0
    %854 = vmatpush.msra.mxu0 0.0
    %855 = vmatpush.msra.mxu0 %v776
    %856 = vmatmul.f32.gmra.mxu0 %v770
    %v857 = vpop.f32.mrf.mxu0
    %v858 = vadd.f32 %v766, %v857
    %859 = vdwg.mxu0
    %860 = vmatpush.msra.mxu0 0.0
    %861 = vmatpush.msra.mxu0 0.0
    %862 = vmatpush.msra.mxu0 0.0
    %863 = vmatpush.msra.mxu0 0.0
    %864 = vmatpush.msra.mxu0 0.0
    %865 = vmatpush.msra.mxu0 0.0
    %866 = vmatpush.msra.mxu0 0.0
    %867 = vmatpush.msra.mxu0 0.0
    %868 = vmatpush.msra.mxu0 0.0
    %869 = vmatpush.msra.mxu0 0.0
    %870 = vmatpush.msra.mxu0 0.0
    %871 = vmatpush.msra.mxu0 0.0
    %872 = vmatpush.msra.mxu0 0.0
    %873 = vmatpush.msra.mxu0 0.0
    %874 = vmatpush.msra.mxu0 0.0
    %875 = vmatpush.msra.mxu0 %v779
    %876 = vmatmul.f32.gmra.mxu0 %v770
    %v877 = vpop.f32.mrf.mxu0
    %v878 = vadd.f32 %v766, %v877
    %879 = vdwg.mxu0
    %880 = vmatpush.msra.mxu0 0.0
    %881 = vmatpush.msra.mxu0 0.0
    %882 = vmatpush.msra.mxu0 0.0
    %883 = vmatpush.msra.mxu0 0.0
    %884 = vmatpush.msra.mxu0 0.0
    %885 = vmatpush.msra.mxu0 0.0
    %886 = vmatpush.msra.mxu0 0.0
    %887 = vmatpush.msra.mxu0 0.0
    %888 = vmatpush.msra.mxu0 0.0
    %889 = vmatpush.msra.mxu0 0.0
    %890 = vmatpush.msra.mxu0 0.0
    %891 = vmatpush.msra.mxu0 0.0
    %892 = vmatpush.msra.mxu0 0.0
    %893 = vmatpush.msra.mxu0 0.0
    %894 = vmatpush.msra.mxu0 0.0
    %895 = vmatpush.msra.mxu0 %v782
    %896 = vmatmul.f32.gmra.mxu0 %v770
    %v897 = vpop.f32.mrf.mxu0
    %v898 = vadd.f32 %v766, %v897
    %899 = vdwg.mxu0
    %900 = vmatpush.msra.mxu0 0.0
    %901 = vmatpush.msra.mxu0 0.0
    %902 = vmatpush.msra.mxu0 0.0
    %903 = vmatpush.msra.mxu0 0.0
    %904 = vmatpush.msra.mxu0 0.0
    %905 = vmatpush.msra.mxu0 0.0
    %906 = vmatpush.msra.mxu0 0.0
    %907 = vmatpush.msra.mxu0 0.0
    %908 = vmatpush.msra.mxu0 0.0
    %909 = vmatpush.msra.mxu0 0.0
    %910 = vmatpush.msra.mxu0 0.0
    %911 = vmatpush.msra.mxu0 0.0
    %912 = vmatpush.msra.mxu0 0.0
    %913 = vmatpush.msra.mxu0 0.0
    %914 = vmatpush.msra.mxu0 0.0
    %915 = vmatpush.msra.mxu0 %v785
    %916 = vmatmul.f32.gmra.mxu0 %v770
    %v917 = vpop.f32.mrf.mxu0
    %v918 = vadd.f32 %v766, %v917
    %919 = vdwg.mxu0
    %920 = vmatpush.msra.mxu0 0.0
    %921 = vmatpush.msra.mxu0 0.0
    %922 = vmatpush.msra.mxu0 0.0
    %923 = vmatpush.msra.mxu0 0.0
    %924 = vmatpush.msra.mxu0 0.0
    %925 = vmatpush.msra.mxu0 0.0
    %926 = vmatpush.msra.mxu0 0.0
    %927 = vmatpush.msra.mxu0 0.0
    %928 = vmatpush.msra.mxu0 0.0
    %929 = vmatpush.msra.mxu0 0.0
    %930 = vmatpush.msra.mxu0 0.0
    %931 = vmatpush.msra.mxu0 0.0
    %932 = vmatpush.msra.mxu0 0.0
    %933 = vmatpush.msra.mxu0 0.0
    %934 = vmatpush.msra.mxu0 0.0
    %935 = vmatpush.msra.mxu0 %v788
    %936 = vmatmul.f32.gmra.mxu0 %v770
    %v937 = vpop.f32.mrf.mxu0
    %v938 = vadd.f32 %v766, %v937
    %939 = vdwg.mxu0
    %940 = vmatpush.msra.mxu0 0.0
    %941 = vmatpush.msra.mxu0 0.0
    %942 = vmatpush.msra.mxu0 0.0
    %943 = vmatpush.msra.mxu0 0.0
    %944 = vmatpush.msra.mxu0 0.0
    %945 = vmatpush.msra.mxu0 0.0
    %946 = vmatpush.msra.mxu0 0.0
    %947 = vmatpush.msra.mxu0 0.0
    %948 = vmatpush.msra.mxu0 0.0
    %949 = vmatpush.msra.mxu0 0.0
    %950 = vmatpush.msra.mxu0 0.0
    %951 = vmatpush.msra.mxu0 0.0
    %952 = vmatpush.msra.mxu0 0.0
    %953 = vmatpush.msra.mxu0 0.0
    %954 = vmatpush.msra.mxu0 0.0
    %955 = vmatpush.msra.mxu0 %v791
    %956 = vmatmul.f32.gmra.mxu0 %v770
    %v957 = vpop.f32.mrf.mxu0
    %v958 = vadd.f32 %v766, %v957
    %959 = vdwg.mxu0
    %960 = vmatpush.msra.mxu0 0.0
    %961 = vmatpush.msra.mxu0 0.0
    %962 = vmatpush.msra.mxu0 0.0
    %963 = vmatpush.msra.mxu0 0.0
    %964 = vmatpush.msra.mxu0 0.0
    %965 = vmatpush.msra.mxu0 0.0
    %966 = vmatpush.msra.mxu0 0.0
    %967 = vmatpush.msra.mxu0 0.0
    %968 = vmatpush.msra.mxu0 0.0
    %969 = vmatpush.msra.mxu0 0.0
    %970 = vmatpush.msra.mxu0 0.0
    %971 = vmatpush.msra.mxu0 0.0
    %972 = vmatpush.msra.mxu0 0.0
    %973 = vmatpush.msra.mxu0 0.0
    %974 = vmatpush.msra.mxu0 0.0
    %975 = vmatpush.msra.mxu0 %v794
    %976 = vmatmul.f32.gmra.mxu0 %v770
    %v977 = vpop.f32.mrf.mxu0
    %v978 = vadd.f32 %v766, %v977
    %979 = vdwg.mxu0
    %980 = vmatpush.msra.mxu0 0.0
    %981 = vmatpush.msra.mxu0 0.0
    %982 = vmatpush.msra.mxu0 0.0
    %983 = vmatpush.msra.mxu0 0.0
    %984 = vmatpush.msra.mxu0 0.0
    %985 = vmatpush.msra.mxu0 0.0
    %986 = vmatpush.msra.mxu0 0.0
    %987 = vmatpush.msra.mxu0 0.0
    %988 = vmatpush.msra.mxu0 0.0
    %989 = vmatpush.msra.mxu0 0.0
    %990 = vmatpush.msra.mxu0 0.0
    %991 = vmatpush.msra.mxu0 0.0
    %992 = vmatpush.msra.mxu0 0.0
    %993 = vmatpush.msra.mxu0 0.0
    %994 = vmatpush.msra.mxu0 0.0
    %995 = vmatpush.msra.mxu0 %v797
    %996 = vmatmul.f32.gmra.mxu0 %v770
    %v997 = vpop.f32.mrf.mxu0
    %v998 = vadd.f32 %v766, %v997
    %999 = vdwg.mxu0
    %1000 = vmatpush.msra.mxu0 0.0
    %1001 = vmatpush.msra.mxu0 0.0
    %1002 = vmatpush.msra.mxu0 0.0
    %1003 = vmatpush.msra.mxu0 0.0
    %1004 = vmatpush.msra.mxu0 0.0
    %1005 = vmatpush.msra.mxu0 0.0
    %1006 = vmatpush.msra.mxu0 0.0
    %1007 = vmatpush.msra.mxu0 0.0
    %1008 = vmatpush.msra.mxu0 0.0
    %1009 = vmatpush.msra.mxu0 0.0
    %1010 = vmatpush.msra.mxu0 0.0
    %1011 = vmatpush.msra.mxu0 0.0
    %1012 = vmatpush.msra.mxu0 0.0
    %1013 = vmatpush.msra.mxu0 0.0
    %1014 = vmatpush.msra.mxu0 0.0
    %1015 = vmatpush.msra.mxu0 %v800
    %1016 = vmatmul.f32.gmra.mxu0 %v770
    %v1017 = vpop.f32.mrf.mxu0
    %v1018 = vadd.f32 %v766, %v1017
    %1019 = vdwg.mxu0
    %1020 = vmatpush.msra.mxu0 0.0
    %1021 = vmatpush.msra.mxu0 0.0
    %1022 = vmatpush.msra.mxu0 0.0
    %1023 = vmatpush.msra.mxu0 0.0
    %1024 = vmatpush.msra.mxu0 0.0
    %1025 = vmatpush.msra.mxu0 0.0
    %1026 = vmatpush.msra.mxu0 0.0
    %1027 = vmatpush.msra.mxu0 0.0
    %1028 = vmatpush.msra.mxu0 0.0
    %1029 = vmatpush.msra.mxu0 0.0
    %1030 = vmatpush.msra.mxu0 0.0
    %1031 = vmatpush.msra.mxu0 0.0
    %1032 = vmatpush.msra.mxu0 0.0
    %1033 = vmatpush.msra.mxu0 0.0
    %1034 = vmatpush.msra.mxu0 0.0
    %1035 = vmatpush.msra.mxu0 %v803
    %1036 = vmatmul.f32.gmra.mxu0 %v770
    %v1037 = vpop.f32.mrf.mxu0
    %v1038 = vadd.f32 %v766, %v1037
    %1039 = vdwg.mxu0
    %1040 = vmatpush.msra.mxu0 0.0
    %1041 = vmatpush.msra.mxu0 0.0
    %1042 = vmatpush.msra.mxu0 0.0
    %1043 = vmatpush.msra.mxu0 0.0
    %1044 = vmatpush.msra.mxu0 0.0
    %1045 = vmatpush.msra.mxu0 0.0
    %1046 = vmatpush.msra.mxu0 0.0
    %1047 = vmatpush.msra.mxu0 0.0
    %1048 = vmatpush.msra.mxu0 0.0
    %1049 = vmatpush.msra.mxu0 0.0
    %1050 = vmatpush.msra.mxu0 0.0
    %1051 = vmatpush.msra.mxu0 0.0
    %1052 = vmatpush.msra.mxu0 0.0
    %1053 = vmatpush.msra.mxu0 0.0
    %1054 = vmatpush.msra.mxu0 0.0
    %1055 = vmatpush.msra.mxu0 %v806
    %1056 = vmatmul.f32.gmra.mxu0 %v770
    %v1057 = vpop.f32.mrf.mxu0
    %v1058 = vadd.f32 %v766, %v1057
    %1059 = vdwg.mxu0
    %1060 = vmatpush.msra.mxu0 0.0
    %1061 = vmatpush.msra.mxu0 0.0
    %1062 = vmatpush.msra.mxu0 0.0
    %1063 = vmatpush.msra.mxu0 0.0
    %1064 = vmatpush.msra.mxu0 0.0
    %1065 = vmatpush.msra.mxu0 0.0
    %1066 = vmatpush.msra.mxu0 0.0
    %1067 = vmatpush.msra.mxu0 0.0
    %1068 = vmatpush.msra.mxu0 0.0
    %1069 = vmatpush.msra.mxu0 0.0
    %1070 = vmatpush.msra.mxu0 0.0
    %1071 = vmatpush.msra.mxu0 0.0
    %1072 = vmatpush.msra.mxu0 0.0
    %1073 = vmatpush.msra.mxu0 0.0
    %1074 = vmatpush.msra.mxu0 0.0
    %1075 = vmatpush.msra.mxu0 %v809
    %1076 = vmatmul.f32.gmra.mxu0 %v770
    %v1077 = vpop.f32.mrf.mxu0
    %v1078 = vadd.f32 %v766, %v1077
    %1079 = vdwg.mxu0
    %1080 = vmatpush.msra.mxu0 0.0
    %1081 = vmatpush.msra.mxu0 0.0
    %1082 = vmatpush.msra.mxu0 0.0
    %1083 = vmatpush.msra.mxu0 0.0
    %1084 = vmatpush.msra.mxu0 0.0
    %1085 = vmatpush.msra.mxu0 0.0
    %1086 = vmatpush.msra.mxu0 0.0
    %1087 = vmatpush.msra.mxu0 0.0
    %1088 = vmatpush.msra.mxu0 0.0
    %1089 = vmatpush.msra.mxu0 0.0
    %1090 = vmatpush.msra.mxu0 0.0
    %1091 = vmatpush.msra.mxu0 0.0
    %1092 = vmatpush.msra.mxu0 0.0
    %1093 = vmatpush.msra.mxu0 0.0
    %1094 = vmatpush.msra.mxu0 0.0
    %1095 = vmatpush.msra.mxu0 %v812
    %1096 = vmatmul.f32.gmra.mxu0 %v770
    %v1097 = vpop.f32.mrf.mxu0
    %v1098 = vadd.f32 %v766, %v1097
    %1099 = vdwg.mxu0
    %1100 = vmatpush.msra.mxu0 0.0
    %1101 = vmatpush.msra.mxu0 0.0
    %1102 = vmatpush.msra.mxu0 0.0
    %1103 = vmatpush.msra.mxu0 0.0
    %1104 = vmatpush.msra.mxu0 0.0
    %1105 = vmatpush.msra.mxu0 0.0
    %1106 = vmatpush.msra.mxu0 0.0
    %1107 = vmatpush.msra.mxu0 0.0
    %1108 = vmatpush.msra.mxu0 0.0
    %1109 = vmatpush.msra.mxu0 0.0
    %1110 = vmatpush.msra.mxu0 0.0
    %1111 = vmatpush.msra.mxu0 0.0
    %1112 = vmatpush.msra.mxu0 0.0
    %1113 = vmatpush.msra.mxu0 0.0
    %1114 = vmatpush.msra.mxu0 0.0
    %1115 = vmatpush.msra.mxu0 %v815
    %1116 = vmatmul.f32.gmra.mxu0 %v770
    %v1117 = vpop.f32.mrf.mxu0
    %v1118 = vadd.f32 %v766, %v1117
    %1119 = vdwg.mxu0
    %1120 = vmatpush.msra.mxu0 0.0
    %1121 = vmatpush.msra.mxu0 0.0
    %1122 = vmatpush.msra.mxu0 0.0
    %1123 = vmatpush.msra.mxu0 0.0
    %1124 = vmatpush.msra.mxu0 0.0
    %1125 = vmatpush.msra.mxu0 0.0
    %1126 = vmatpush.msra.mxu0 0.0
    %1127 = vmatpush.msra.mxu0 0.0
    %1128 = vmatpush.msra.mxu0 0.0
    %1129 = vmatpush.msra.mxu0 0.0
    %1130 = vmatpush.msra.mxu0 0.0
    %1131 = vmatpush.msra.mxu0 0.0
    %1132 = vmatpush.msra.mxu0 0.0
    %1133 = vmatpush.msra.mxu0 0.0
    %1134 = vmatpush.msra.mxu0 0.0
    %1135 = vmatpush.msra.mxu0 %v818
    %1136 = vmatmul.f32.gmra.mxu0 %v770
    %v1137 = vpop.f32.mrf.mxu0
    %v1138 = vadd.f32 %v766, %v1137
    %1139 = vdwg.mxu0
    %v1140 = vtanh.pop %v838
    %v1141 = vtanh.pop %v858
    %v1142 = vtanh.pop %v878
    %v1143 = vtanh.pop %v898
    %v1144 = vtanh.pop %v918
    %v1145 = vtanh.pop %v938
    %v1146 = vtanh.pop %v958
    %v1147 = vtanh.pop %v978
    %v1148 = vtanh.pop %v998
    %v1149 = vtanh.pop %v1018
    %v1150 = vtanh.pop %v1038
    %v1151 = vtanh.pop %v1058
    %v1152 = vtanh.pop %v1078
    %v1153 = vtanh.pop %v1098
    %v1154 = vtanh.pop %v1118
    %v1155 = vtanh.pop %v1138
    %v1172 = vrot.slane %v1141, 4
    %v1173 = vrot.slane %v1143, 4
    %v1174 = vrot.slane %v1145, 4
    %v1175 = vrot.slane %v1147, 4
    %v1176 = vrot.slane %v1149, 4
    %v1177 = vrot.slane %v1151, 4
    %v1178 = vrot.slane %v1153, 4
    %v1179 = vrot.slane %v1155, 4
    %v1180 = vsel %vm39, %v1140, %v1172
    %v1181 = vsel %vm39, %v1142, %v1173
    %v1182 = vsel %vm39, %v1144, %v1174
    %v1183 = vsel %vm39, %v1146, %v1175
    %v1184 = vsel %vm39, %v1148, %v1176
    %v1185 = vsel %vm39, %v1150, %v1177
    %v1186 = vsel %vm39, %v1152, %v1178
    %v1187 = vsel %vm39, %v1154, %v1179
    %1196 = vst [vmem:[#allocation4] sm:$0x77] %v1180
    %1197 = vst [vmem:[#allocation4 + $0x8] sm:$0x77] %v1181
    %1198 = vst [vmem:[#allocation4 + $0x10] sm:$0x77] %v1182
    %1199 = vst [vmem:[#allocation4 + $0x18] sm:$0x77] %v1183
    %1200 = vst [vmem:[#allocation4 + $0x20] sm:$0x77] %v1184
    %1201 = vst [vmem:[#allocation4 + $0x28] sm:$0x77] %v1185
    %1202 = vst [vmem:[#allocation4 + $0x30] sm:$0x77] %v1186
    %1203 = vst [vmem:[#allocation4 + $0x38] sm:$0x77] %v1187
    // Predicated region
    $region30: #{tpu_custom_call.1} parent=1 // pred_check
      _
    $region31: #{tpu_custom_call.1} parent=1 // pred_check_branch
      %1205 = sbr.rel (0) target = $region33
    $region32: #{tpu_custom_call.1} parent=1 // pred_region
      %1207 = vsyncadd [#allocation5], 0
      %s1209 = sshll.u32 [#allocation4], 4
      %s1210 = int_to_ptr.vmem [resolvable:$true] %s1209
      %s1211 = sshll.u32 %s7, 4
      %s1212 = int_to_ptr.hbm [resolvable:$true] %s1211
      %1214 = dma.vmem_to_hbm [thread:$0]  %s1210, 1024, %s1212, [#allocation5]
    $region33: #{tpu_custom_call.1} parent=1 // pred_fallthru
      _
    // Predicated region
    $region34: #{tpu_custom_call.1} parent=1 // pred_check
      _
    $region35: #{tpu_custom_call.1} parent=1 // pred_check_branch
      %1216 = sbr.rel (0) target = $region37
    $region36: #{tpu_custom_call.1} parent=1 // pred_region
      %1218 = dma.done [#allocation5], 1024
    $region37: #{tpu_custom_call.1} parent=1 // pred_fallthru
      _
    %1219 = vsyncpa [#allocation5], 1

</llo_original>
